<compile_context>
chip_gen: v5e
topology: v5e:2x2
jax: 0.10.0
libtpu: 0.0.40
codegen_flags: <defaults>
</compile_context>

<pallas_src>
import numpy as np

import jax
import jax.numpy as jnp
from jax.experimental import pallas as pl
from jax.experimental.pallas import tpu as pltpu


def _mhsa_kernel(x_ref, wqkv_ref, bqkv_ref, wo_ref, bo_ref, pool_ref, expand_ref, o_ref):
    bb, T, D = x_ref.shape
    n_heads = pool_ref.shape[1]
    R = bb * T

    x = x_ref[...].reshape(R, D)                                    # (R, D)

    # Fused QKV projection; weights already transposed to (D, 3D) in wrapper.
    qkv = jnp.dot(x, wqkv_ref[...], preferred_element_type=jnp.float32)
    qkv = qkv + bqkv_ref[...]
    q = qkv[:, 0 * D:1 * D].reshape(bb, T, D)
    k = qkv[:, 1 * D:2 * D].reshape(bb, T, D)
    v = qkv[:, 2 * D:3 * D].reshape(bb, T, D)

    # scores[b,t,s,h] = (1/sqrt(d_k)) * sum_{d in head h} q[b,t,d] * k[b,s,d]
    # (scale is folded into the head-pooling matrix).
    prod = q[:, :, None, :] * k[:, None, :, :]                      # (bb,T,T,D) on VPU
    scores = jnp.dot(prod.reshape(R * T, D), pool_ref[...],
                     preferred_element_type=jnp.float32)
    scores = scores.reshape(bb, T, T, n_heads)

    # Numerically stable softmax over the key axis s (axis=2), normalized in
    # the compact h-lane representation (exact reciprocal for tolerance).
    m = jnp.max(scores, axis=2, keepdims=True)                      # (bb,T,1,h)
    e = jnp.exp(scores - m)                                         # (bb,T,T,h)
    inv_l = 1.0 / jnp.sum(e, axis=2, keepdims=True)                 # (bb,T,1,h)
    att = e * inv_l                                                 # (bb,T,T,h)

    # Expand per-head weights back onto D lanes (0/1 matrix), then a VPU
    # multiply-accumulate over the key axis.
    att_exp = jnp.dot(att.reshape(R * T, n_heads), expand_ref[...],
                      preferred_element_type=jnp.float32)
    att_exp = att_exp.reshape(bb, T, T, D)
    ctx = jnp.sum(att_exp * v[:, None, :, :], axis=2)               # (bb,T,D)

    # Output projection (weight pre-transposed to (D, D)).
    out = jnp.dot(ctx.reshape(R, D), wo_ref[...],
                  preferred_element_type=jnp.float32)
    out = out + bo_ref[...]
    o_ref[...] = out.reshape(bb, T, D).astype(o_ref.dtype)
    # TODO(synk): dropout on attention weights omitted (eval-mode identity);
    # the module's `self.att` side attribute is not materialized.


def _tensorcores_per_chip():
    """v7x has 2 TensorCores per chip; v5e/v6e have 1 (grid would be serial)."""
    try:
        kind = jax.devices()[0].device_kind.lower()
    except Exception:
        return 1
    if "v7" in kind or "7x" in kind:
        return 2
    return 1


def multi_head_self_attention(x_flat, batch_size, params, n_heads, *, batch_block=None):
    """x_flat: (batch*seq, n_units) float32. Returns (batch*seq, n_units)."""
    N, D = x_flat.shape
    assert N % batch_size == 0 and D % n_heads == 0
    T = N // batch_size
    d_k = D // n_heads

    wq, bq, wk, bk, wv, bv, wo, bo = params

    # One-time wrapper-side prep: pre-transpose to (in, out) and fuse Q/K/V.
    wqkv_t = jnp.concatenate([wq.T, wk.T, wv.T], axis=1)            # (D, 3D)
    bqkv = jnp.concatenate([bq, bk, bv]).reshape(1, 3 * D)          # (1, 3D)
    wo_t = wo.T                                                     # (D, D)
    bo2 = bo.reshape(1, D)                                          # (1, D)

    # Constant head-pooling (D, h) with 1/sqrt(d_k) folded in and 0/1
    # head-expansion (h, D) matrices, built once on the host.
    head_onehot = np.kron(np.eye(n_heads, dtype=np.float32),
                          np.ones((d_k, 1), np.float32))            # (D, h)
    pool = jnp.asarray(head_onehot / np.sqrt(d_k))                  # (D, h)
    expand = jnp.asarray(head_onehot.T)                             # (h, D)

    # Collapse the grid on single-TC chips; keep batch parallelism on v7x.
    if batch_block is None:
        n_tc = _tensorcores_per_chip()
        batch_block = batch_size if n_tc == 1 else max(1, batch_size // n_tc)
    while batch_size % batch_block:
        batch_block -= 1
    grid = (batch_size // batch_block,)

    x = x_flat.reshape(batch_size, T, D)

    out = pl.pallas_call(
        _mhsa_kernel,
        out_shape=jax.ShapeDtypeStruct((batch_size, T, D), x_flat.dtype),
        grid_spec=pltpu.PrefetchScalarGridSpec(
            num_scalar_prefetch=0,
            grid=grid,
            in_specs=[
                pl.BlockSpec((batch_block, T, D), lambda i: (i, 0, 0)),  # x
                pl.BlockSpec((D, 3 * D), lambda i: (0, 0)),              # Wqkv^T
                pl.BlockSpec((1, 3 * D), lambda i: (0, 0)),              # bqkv
                pl.BlockSpec((D, D), lambda i: (0, 0)),                  # Wo^T
                pl.BlockSpec((1, D), lambda i: (0, 0)),                  # bo
                pl.BlockSpec((D, n_heads), lambda i: (0, 0)),            # pool
                pl.BlockSpec((n_heads, D), lambda i: (0, 0)),            # expand
            ],
            out_specs=pl.BlockSpec((batch_block, T, D), lambda i: (i, 0, 0)),
        ),
        compiler_params=pltpu.CompilerParams(
            dimension_semantics=("parallel",)),
    )(x, wqkv_t, bqkv, wo_t, bo2, pool, expand)

    return out.reshape(N, D)


def _reference(x_flat, batch_size, params, n_heads):
    """Pure-JAX reference mirroring the PyTorch forward (dropout = identity)."""
    N, D = x_flat.shape
    T = N // batch_size
    d_k = D // n_heads
    wq, bq, wk, bk, wv, bv, wo, bo = params
    q = (x_flat @ wq.T + bq).reshape(batch_size, T, n_heads, d_k)
    k = (x_flat @ wk.T + bk).reshape(batch_size, T, n_heads, d_k)
    v = (x_flat @ wv.T + bv).reshape(batch_size, T, n_heads, d_k)
    scores = jnp.einsum('bthd,bshd->bhts', q, k) / np.sqrt(d_k)
    att = jax.nn.softmax(scores, axis=3)
    ctx = jnp.einsum('bhts,bshd->bthd', att, v).reshape(N, D)
    return ctx @ wo.T + bo


if __name__ == "__main__":
    # Shapes consistent with the module: n_units=32, h=8 heads (d_k=4),
    # batch=2, seq=8  ->  x is (batch*seq, n_units) = (16, 32).
    n_units = 32
    n_heads = 8
    batch_size = 2
    seq_len = 8

    key = jax.random.PRNGKey(0)
    keys = jax.random.split(key, 9)
    x = jax.random.normal(keys[0], (batch_size * seq_len, n_units), jnp.float32)

    def init_linear(kw, kb):
        bound = 1.0 / np.sqrt(n_units)
        w = jax.random.uniform(kw, (n_units, n_units), jnp.float32, -bound, bound)
        b = jax.random.uniform(kb, (n_units,), jnp.float32, -bound, bound)
        return w, b

    wq, bq = init_linear(keys[1], keys[2])
    wk, bk = init_linear(keys[3], keys[4])
    wv, bv = init_linear(keys[5], keys[6])
    wo, bo = init_linear(keys[7], keys[8])
    params = (wq, bq, wk, bk, wv, bv, wo, bo)

    out = multi_head_self_attention(x, batch_size, params, n_heads)
    out = jax.block_until_ready(out)

    ref = _reference(x, batch_size, params, n_heads)
    np.testing.assert_allclose(np.asarray(out), np.asarray(ref), rtol=1e-5, atol=1e-5)

    print("KERNEL_OK")
</pallas_src>

<mosaic_0001>
module attributes {stable_mosaic.version = 11 : i64} {
  func.func @_mhsa_kernel(%arg0: i32, %arg1: memref<2x8x32xf32, #tpu.memory_space<vmem>>, %arg2: memref<32x96xf32, #tpu.memory_space<vmem>>, %arg3: memref<1x96xf32, #tpu.memory_space<vmem>>, %arg4: memref<32x32xf32, #tpu.memory_space<vmem>>, %arg5: memref<1x32xf32, #tpu.memory_space<vmem>>, %arg6: memref<32x8xf32, #tpu.memory_space<vmem>>, %arg7: memref<8x32xf32, #tpu.memory_space<vmem>>, %arg8: memref<2x8x32xf32, #tpu.memory_space<vmem>>) attributes {dimension_semantics = [#tpu.dimension_semantics<parallel>], iteration_bounds = array<i64: 1>, scalar_prefetch = 0 : i64, scratch_operands = 0 : i64, tpu.core_type = #tpu.core_type<tc>, window_params = [{transform_indices = @transform_0, window_bounds = array<i64: 2, 8, 32>}, {pipeline_mode = #tpu.pipeline_mode<synchronous>, transform_indices = @transform_1, window_bounds = array<i64: 32, 96>}, {pipeline_mode = #tpu.pipeline_mode<synchronous>, transform_indices = @transform_2, window_bounds = array<i64: 1, 96>}, {pipeline_mode = #tpu.pipeline_mode<synchronous>, transform_indices = @transform_3, window_bounds = array<i64: 32, 32>}, {pipeline_mode = #tpu.pipeline_mode<synchronous>, transform_indices = @transform_4, window_bounds = array<i64: 1, 32>}, {pipeline_mode = #tpu.pipeline_mode<synchronous>, transform_indices = @transform_5, window_bounds = array<i64: 32, 8>}, {pipeline_mode = #tpu.pipeline_mode<synchronous>, transform_indices = @transform_6, window_bounds = array<i64: 8, 32>}, {transform_indices = @transform_7, window_bounds = array<i64: 2, 8, 32>}]} {
    %c0 = arith.constant 0 : index
    %c0_0 = arith.constant 0 : index
    %c0_1 = arith.constant 0 : index
    %0 = vector.load %arg1[%c0, %c0_0, %c0_1] : memref<2x8x32xf32, #tpu.memory_space<vmem>>, vector<2x8x32xf32>
    %1 = vector.shape_cast %0 : vector<2x8x32xf32> to vector<16x32xf32>
    %c0_2 = arith.constant 0 : index
    %c0_3 = arith.constant 0 : index
    %2 = vector.load %arg2[%c0_2, %c0_3] : memref<32x96xf32, #tpu.memory_space<vmem>>, vector<32x96xf32>
    %cst = arith.constant dense<0.000000e+00> : vector<16x96xf32>
    %3 = tpu.matmul %1, %2, %cst {dimension_numbers = #tpu.dot_dimension_numbers<[1], [0], [0], [1], [0, 0, 1, 1], [], []>} : vector<16x32xf32>, vector<32x96xf32>, vector<16x96xf32> -> vector<16x96xf32>
    %c0_4 = arith.constant 0 : index
    %c0_5 = arith.constant 0 : index
    %4 = vector.load %arg3[%c0_4, %c0_5] : memref<1x96xf32, #tpu.memory_space<vmem>>, vector<1x96xf32>
    %5 = vector.broadcast %4 : vector<1x96xf32> to vector<16x96xf32>
    %6 = arith.addf %3, %5 : vector<16x96xf32>
    %7 = vector.extract_strided_slice %6 {offsets = [0, 0], sizes = [16, 32], strides = [1, 1]} : vector<16x96xf32> to vector<16x32xf32>
    %8 = vector.shape_cast %7 : vector<16x32xf32> to vector<2x8x32xf32>
    %9 = vector.extract_strided_slice %6 {offsets = [0, 32], sizes = [16, 32], strides = [1, 1]} : vector<16x96xf32> to vector<16x32xf32>
    %10 = vector.shape_cast %9 : vector<16x32xf32> to vector<2x8x32xf32>
    %11 = vector.extract_strided_slice %6 {offsets = [0, 64], sizes = [16, 32], strides = [1, 1]} : vector<16x96xf32> to vector<16x32xf32>
    %12 = vector.shape_cast %11 : vector<16x32xf32> to vector<2x8x32xf32>
    %13 = vector.shape_cast %8 : vector<2x8x32xf32> to vector<2x8x1x32xf32>
    %14 = vector.shape_cast %10 : vector<2x8x32xf32> to vector<2x1x8x32xf32>
    %15 = vector.broadcast %13 : vector<2x8x1x32xf32> to vector<2x8x8x32xf32>
    %16 = vector.broadcast %14 : vector<2x1x8x32xf32> to vector<2x8x8x32xf32>
    %17 = arith.mulf %15, %16 : vector<2x8x8x32xf32>
    %18 = vector.shape_cast %17 : vector<2x8x8x32xf32> to vector<128x32xf32>
    %c0_6 = arith.constant 0 : index
    %c0_7 = arith.constant 0 : index
    %19 = vector.load %arg6[%c0_6, %c0_7] : memref<32x8xf32, #tpu.memory_space<vmem>>, vector<32x8xf32>
    %cst_8 = arith.constant dense<0.000000e+00> : vector<128x8xf32>
    %20 = tpu.matmul %18, %19, %cst_8 {dimension_numbers = #tpu.dot_dimension_numbers<[1], [0], [0], [1], [0, 0, 1, 1], [], []>} : vector<128x32xf32>, vector<32x8xf32>, vector<128x8xf32> -> vector<128x8xf32>
    %21 = vector.shape_cast %20 : vector<128x8xf32> to vector<2x8x8x8xf32>
    %cst_9 = arith.constant dense<0xFF800000> : vector<2x8x8xf32>
    %22 = vector.multi_reduction <maximumf>, %21, %cst_9 [2] : vector<2x8x8x8xf32> to vector<2x8x8xf32>
    %23 = vector.shape_cast %22 : vector<2x8x8xf32> to vector<2x8x1x8xf32>
    %24 = vector.broadcast %23 : vector<2x8x1x8xf32> to vector<2x8x8x8xf32>
    %25 = arith.subf %21, %24 : vector<2x8x8x8xf32>
    %26 = math.exp %25 : vector<2x8x8x8xf32>
    %cst_10 = arith.constant dense<0.000000e+00> : vector<2x8x8xf32>
    %27 = vector.multi_reduction <add>, %26, %cst_10 [2] : vector<2x8x8x8xf32> to vector<2x8x8xf32>
    %28 = vector.shape_cast %27 : vector<2x8x8xf32> to vector<2x8x1x8xf32>
    %cst_11 = arith.constant 1.000000e+00 : f32
    %29 = vector.broadcast %cst_11 : f32 to vector<2x8x1x8xf32>
    %30 = arith.divf %29, %28 : vector<2x8x1x8xf32>
    %31 = vector.broadcast %30 : vector<2x8x1x8xf32> to vector<2x8x8x8xf32>
    %32 = arith.mulf %26, %31 : vector<2x8x8x8xf32>
    %33 = vector.shape_cast %32 : vector<2x8x8x8xf32> to vector<128x8xf32>
    %c0_12 = arith.constant 0 : index
    %c0_13 = arith.constant 0 : index
    %34 = vector.load %arg7[%c0_12, %c0_13] : memref<8x32xf32, #tpu.memory_space<vmem>>, vector<8x32xf32>
    %cst_14 = arith.constant dense<0.000000e+00> : vector<128x32xf32>
    %35 = tpu.matmul %33, %34, %cst_14 {dimension_numbers = #tpu.dot_dimension_numbers<[1], [0], [0], [1], [0, 0, 1, 1], [], []>} : vector<128x8xf32>, vector<8x32xf32>, vector<128x32xf32> -> vector<128x32xf32>
    %36 = vector.shape_cast %35 : vector<128x32xf32> to vector<2x8x8x32xf32>
    %37 = vector.shape_cast %12 : vector<2x8x32xf32> to vector<2x1x8x32xf32>
    %38 = vector.broadcast %37 : vector<2x1x8x32xf32> to vector<2x8x8x32xf32>
    %39 = arith.mulf %36, %38 : vector<2x8x8x32xf32>
    %cst_15 = arith.constant dense<0.000000e+00> : vector<2x8x32xf32>
    %40 = vector.multi_reduction <add>, %39, %cst_15 [2] : vector<2x8x8x32xf32> to vector<2x8x32xf32>
    %41 = vector.shape_cast %40 : vector<2x8x32xf32> to vector<16x32xf32>
    %c0_16 = arith.constant 0 : index
    %c0_17 = arith.constant 0 : index
    %42 = vector.load %arg4[%c0_16, %c0_17] : memref<32x32xf32, #tpu.memory_space<vmem>>, vector<32x32xf32>
    %cst_18 = arith.constant dense<0.000000e+00> : vector<16x32xf32>
    %43 = tpu.matmul %41, %42, %cst_18 {dimension_numbers = #tpu.dot_dimension_numbers<[1], [0], [0], [1], [0, 0, 1, 1], [], []>} : vector<16x32xf32>, vector<32x32xf32>, vector<16x32xf32> -> vector<16x32xf32>
    %c0_19 = arith.constant 0 : index
    %c0_20 = arith.constant 0 : index
    %44 = vector.load %arg5[%c0_19, %c0_20] : memref<1x32xf32, #tpu.memory_space<vmem>>, vector<1x32xf32>
    %45 = vector.broadcast %44 : vector<1x32xf32> to vector<16x32xf32>
    %46 = arith.addf %43, %45 : vector<16x32xf32>
    %47 = vector.shape_cast %46 : vector<16x32xf32> to vector<2x8x32xf32>
    %c0_21 = arith.constant 0 : index
    %c0_22 = arith.constant 0 : index
    %c0_23 = arith.constant 0 : index
    %48 = vector.load %arg8[%c0_21, %c0_22, %c0_23] : memref<2x8x32xf32, #tpu.memory_space<vmem>>, vector<2x8x32xf32>
    tpu.vector_store %arg8[%c0_21, %c0_22, %c0_23], %47 {strides = array<i32>} : memref<2x8x32xf32, #tpu.memory_space<vmem>>, vector<2x8x32xf32>,
    return
  }
  func.func @transform_0(%arg0: i32) -> (i32, i32, i32) {
    %c0_i32 = arith.constant 0 : i32
    %c0_i32_0 = arith.constant 0 : i32
    %c0_i32_1 = arith.constant 0 : i32
    return %arg0, %c0_i32, %c0_i32_0 : i32, i32, i32
  }
  func.func @transform_1(%arg0: i32) -> (i32, i32) {
    %c0_i32 = arith.constant 0 : i32
    %c0_i32_0 = arith.constant 0 : i32
    %c0_i32_1 = arith.constant 0 : i32
    return %c0_i32, %c0_i32_0 : i32, i32
  }
  func.func @transform_2(%arg0: i32) -> (i32, i32) {
    %c0_i32 = arith.constant 0 : i32
    %c0_i32_0 = arith.constant 0 : i32
    %c0_i32_1 = arith.constant 0 : i32
    return %c0_i32, %c0_i32_0 : i32, i32
  }
  func.func @transform_3(%arg0: i32) -> (i32, i32) {
    %c0_i32 = arith.constant 0 : i32
    %c0_i32_0 = arith.constant 0 : i32
    %c0_i32_1 = arith.constant 0 : i32
    return %c0_i32, %c0_i32_0 : i32, i32
  }
  func.func @transform_4(%arg0: i32) -> (i32, i32) {
    %c0_i32 = arith.constant 0 : i32
    %c0_i32_0 = arith.constant 0 : i32
    %c0_i32_1 = arith.constant 0 : i32
    return %c0_i32, %c0_i32_0 : i32, i32
  }
  func.func @transform_5(%arg0: i32) -> (i32, i32) {
    %c0_i32 = arith.constant 0 : i32
    %c0_i32_0 = arith.constant 0 : i32
    %c0_i32_1 = arith.constant 0 : i32
    return %c0_i32, %c0_i32_0 : i32, i32
  }
  func.func @transform_6(%arg0: i32) -> (i32, i32) {
    %c0_i32 = arith.constant 0 : i32
    %c0_i32_0 = arith.constant 0 : i32
    %c0_i32_1 = arith.constant 0 : i32
    return %c0_i32, %c0_i32_0 : i32, i32
  }
  func.func @transform_7(%arg0: i32) -> (i32, i32, i32) {
    %c0_i32 = arith.constant 0 : i32
    %c0_i32_0 = arith.constant 0 : i32
    %c0_i32_1 = arith.constant 0 : i32
    return %arg0, %c0_i32, %c0_i32_0 : i32, i32, i32
  }
}

</mosaic_0001>

<llo_original>
// kernel: tpu_custom_call.1
$region0: #{tpu_custom_call.1}
  #allocation0 [shape = 'u32[]', space=smem, size = 0x4, offset = 0x4, fixed_abs, tag = 'smem constant byte address 0x4 - core index']
  #allocation1 [shape = 'u32[72,128]{1,0:T(1,128)}', space=vmem, size = 0x9000, scoped, tag = 'internal scratch']
  %s0 = inlined_call_operand.hbm [shape: f32[2,8,32], index: 0, kind: input, shape index: {}]
  %s1 = inlined_call_operand.vmem [shape: f32[32,96], index: 1, kind: input, shape index: {}]
  %s2 = inlined_call_operand.vmem [shape: f32[1,96], index: 2, kind: input, shape index: {}]
  %s3 = inlined_call_operand.hbm [shape: f32[32,32], index: 3, kind: input, shape index: {}]
  %s4 = inlined_call_operand.vmem [shape: f32[1,32], index: 4, kind: input, shape index: {}]
  %s5 = inlined_call_operand.vmem [shape: f32[32,8], index: 5, kind: input, shape index: {}]
  %s6 = inlined_call_operand.vmem [shape: f32[8,32], index: 6, kind: input, shape index: {}]
  %s7 = inlined_call_operand.hbm [shape: f32[2,8,32], index: 7, kind: output, shape index: {}]
  %s8 = sld [smem:[#allocation0]]
  $region46: #{tpu_custom_call.1} parent=0
    _
  %s10 = ssub.s32 1, %s8
  %s11 = scalar_select 0, %s10, %s8
  $region1: #{tpu_custom_call.1} parent=0
    #allocation2 [shape = 'u8[8192]{0}', space=vmem, size = 0x2000, scoped, tag = 'input window, operand 0, single buffered']
    #allocation3 [shape = 's32[1]{0}', space=sflag, size = 0x4, scoped, tag = 'scoped memory for tpu_custom_call.1']
    #allocation4 [shape = 's32[1]{0}', space=sflag, size = 0x4, scoped, tag = 'scoped memory for tpu_custom_call.1']
    #allocation5 [shape = 'u8[16384]{0}', space=vmem, size = 0x4000, scoped, tag = 'input window, operand 3, single buffered']
    #allocation6 [shape = 's32[1]{0}', space=sflag, size = 0x4, scoped, tag = 'scoped memory for tpu_custom_call.1']
    #allocation7 [shape = 'u8[8192]{0}', space=vmem, size = 0x2000, scoped, tag = 'output window, operand 0, single buffered']
    %12 = vsyncpa [#allocation3], 0
    %13 = vsyncpa [#allocation6], 0
    %14 = vsyncpa [#allocation4], 0
    // Predicated region
    $region2: #{tpu_custom_call.1} parent=1 // pred_check
      _
    $region3: #{tpu_custom_call.1} parent=1 // pred_check_branch
      %16 = sbr.rel (0) target = $region5
    $region4: #{tpu_custom_call.1} parent=1 // pred_region
      %18 = vsyncadd [#allocation3], 0
      %s19 = sshll.u32 %s0, 4
      %s20 = int_to_ptr.hbm [resolvable:$true] %s19
      %s21 = sshll.u32 [#allocation2], 4
      %s22 = int_to_ptr.vmem [resolvable:$true] %s21
      %27 = dma.hbm_to_vmem [thread:$0]  %s20, 256, %s22, [#allocation3], 128, 128, 8
    $region5: #{tpu_custom_call.1} parent=1 // pred_fallthru
      _
    // Predicated region
    $region6: #{tpu_custom_call.1} parent=1 // pred_check
      _
    $region7: #{tpu_custom_call.1} parent=1 // pred_check_branch
      %29 = sbr.rel (0) target = $region9
    $region8: #{tpu_custom_call.1} parent=1 // pred_region
      _
    $region9: #{tpu_custom_call.1} parent=1 // pred_fallthru
      _
    // Predicated region
    $region10: #{tpu_custom_call.1} parent=1 // pred_check
      _
    $region11: #{tpu_custom_call.1} parent=1 // pred_check_branch
      %31 = sbr.rel (0) target = $region13
    $region12: #{tpu_custom_call.1} parent=1 // pred_region
      _
    $region13: #{tpu_custom_call.1} parent=1 // pred_fallthru
      _
    // Predicated region
    $region14: #{tpu_custom_call.1} parent=1 // pred_check
      _
    $region15: #{tpu_custom_call.1} parent=1 // pred_check_branch
      %33 = sbr.rel (0) target = $region17
    $region16: #{tpu_custom_call.1} parent=1 // pred_region
      %35 = vsyncadd [#allocation6], 0
      %s36 = sshll.u32 %s3, 4
      %s37 = int_to_ptr.hbm [resolvable:$true] %s36
      %s38 = sshll.u32 [#allocation5], 4
      %s39 = int_to_ptr.vmem [resolvable:$true] %s38
      %44 = dma.hbm_to_vmem [thread:$0]  %s37, 512, %s39, [#allocation6], 128, 128, 8
    $region17: #{tpu_custom_call.1} parent=1 // pred_fallthru
      _
    // Predicated region
    $region18: #{tpu_custom_call.1} parent=1 // pred_check
      _
    $region19: #{tpu_custom_call.1} parent=1 // pred_check_branch
      %46 = sbr.rel (0) target = $region21
    $region20: #{tpu_custom_call.1} parent=1 // pred_region
      _
    $region21: #{tpu_custom_call.1} parent=1 // pred_fallthru
      _
    // Predicated region
    $region22: #{tpu_custom_call.1} parent=1 // pred_check
      _
    $region23: #{tpu_custom_call.1} parent=1 // pred_check_branch
      %48 = sbr.rel (0) target = $region25
    $region24: #{tpu_custom_call.1} parent=1 // pred_region
      _
    $region25: #{tpu_custom_call.1} parent=1 // pred_fallthru
      _
    // Predicated region
    $region26: #{tpu_custom_call.1} parent=1 // pred_check
      _
    $region27: #{tpu_custom_call.1} parent=1 // pred_check_branch
      %50 = sbr.rel (0) target = $region29
    $region28: #{tpu_custom_call.1} parent=1 // pred_region
      _
    $region29: #{tpu_custom_call.1} parent=1 // pred_fallthru
      _
    // Predicated region
    $region30: #{tpu_custom_call.1} parent=1 // pred_check
      _
    $region31: #{tpu_custom_call.1} parent=1 // pred_check_branch
      %52 = sbr.rel (0) target = $region33
    $region32: #{tpu_custom_call.1} parent=1 // pred_region
      %54 = dma.done [#allocation3], 256
    $region33: #{tpu_custom_call.1} parent=1 // pred_fallthru
      _
    // Predicated region
    $region34: #{tpu_custom_call.1} parent=1 // pred_check
      _
    $region35: #{tpu_custom_call.1} parent=1 // pred_check_branch
      %56 = sbr.rel (0) target = $region37
    $region36: #{tpu_custom_call.1} parent=1 // pred_region
      %58 = dma.done [#allocation6], 512
    $region37: #{tpu_custom_call.1} parent=1 // pred_fallthru
      _
    %v59 = vld [vmem:[#allocation2] sm:$0xff]
    %v60 = vld [vmem:[#allocation2 + $0x8] sm:$0xff]
    %v61 = vld [vmem:[%s1] sm:$0xff]
    %v62 = vld [vmem:[%s1 + $0x8] sm:$0xff]
    %v63 = vld [vmem:[%s1 + $0x10] sm:$0xff]
    %v64 = vld [vmem:[%s1 + $0x18] sm:$0xff]
    %v65 = vld [vmem:[%s2] sm:$0x1]
    %v67 = vperm.slane %v65, 0
    %vm69 = vcmask 261120
    %v71 = vsel %vm69, %v59, 0
    %v74 = vsel %vm69, %v60, 0
    %76 = vmatpush.msra.mxu0 0.0
    %77 = vmatpush.msra.mxu0 0.0
    %78 = vmatpush.msra.mxu0 0.0
    %79 = vmatpush.msra.mxu0 0.0
    %80 = vmatpush.msra.mxu0 0.0
    %81 = vmatpush.msra.mxu0 0.0
    %82 = vmatpush.msra.mxu0 0.0
    %83 = vmatpush.msra.mxu0 0.0
    %84 = vmatpush.msra.mxu0 0.0
    %85 = vmatpush.msra.mxu0 0.0
    %86 = vmatpush.msra.mxu0 0.0
    %87 = vmatpush.msra.mxu0 0.0
    %88 = vmatpush.msra.mxu0 %v64
    %89 = vmatpush.msra.mxu0 %v63
    %90 = vmatpush.msra.mxu0 %v62
    %91 = vmatpush.msra.mxu0 %v61
    %92 = vmatmul.f32.gmra.mxu0 %v71
    %v93 = vpop.f32.mrf.mxu0
    %v94 = vadd.f32 %v67, %v93
    %95 = vmatmul.f32.gmra.mxu0 %v74
    %v96 = vpop.f32.mrf.mxu0
    %v97 = vadd.f32 %v67, %v96
    %98 = vdwg.mxu0
    %v101 = vrot.slane %v94, 1
    %v102 = vrot.slane %v94, 2
    %v103 = vrot.slane %v94, 3
    %v104 = vrot.slane %v94, 4
    %v105 = vrot.slane %v94, 5
    %v106 = vrot.slane %v94, 6
    %v107 = vrot.slane %v94, 7
    %v108 = vrot.slane %v97, 1
    %v109 = vrot.slane %v97, 2
    %v110 = vrot.slane %v97, 3
    %v111 = vrot.slane %v97, 4
    %v112 = vrot.slane %v97, 5
    %v113 = vrot.slane %v97, 6
    %v114 = vrot.slane %v97, 7
    %v115 = vperm.slane %v94, 0
    %v116 = vperm.slane %v101, 0
    %v117 = vperm.slane %v102, 0
    %v118 = vperm.slane %v103, 0
    %v119 = vperm.slane %v104, 0
    %v120 = vperm.slane %v105, 0
    %v121 = vperm.slane %v106, 0
    %v122 = vperm.slane %v107, 0
    %v123 = vperm.slane %v97, 0
    %v124 = vperm.slane %v108, 0
    %v125 = vperm.slane %v109, 0
    %v126 = vperm.slane %v110, 0
    %v127 = vperm.slane %v111, 0
    %v128 = vperm.slane %v112, 0
    %v129 = vperm.slane %v113, 0
    %v130 = vperm.slane %v114, 0
    %147 = vrot.lane.b32.xlu0 %v94, 96
    %v148 = vpop.permute.xlu0 %147
    %149 = vrot.lane.b32.xlu0 %v97, 96
    %v150 = vpop.permute.xlu0 %149
    %v153 = vmul.f32 %v115, %v148
    %v154 = vmul.f32 %v116, %v148
    %v155 = vmul.f32 %v117, %v148
    %v156 = vmul.f32 %v118, %v148
    %v157 = vmul.f32 %v119, %v148
    %v158 = vmul.f32 %v120, %v148
    %v159 = vmul.f32 %v121, %v148
    %v160 = vmul.f32 %v122, %v148
    %v161 = vmul.f32 %v123, %v150
    %v162 = vmul.f32 %v124, %v150
    %v163 = vmul.f32 %v125, %v150
    %v164 = vmul.f32 %v126, %v150
    %v165 = vmul.f32 %v127, %v150
    %v166 = vmul.f32 %v128, %v150
    %v167 = vmul.f32 %v129, %v150
    %v168 = vmul.f32 %v130, %v150
    %v169 = vld [vmem:[%s5] sm:$0xff]
    %v170 = vld [vmem:[%s5 + $0x8] sm:$0xff]
    %v171 = vld [vmem:[%s5 + $0x10] sm:$0xff]
    %v172 = vld [vmem:[%s5 + $0x18] sm:$0xff]
    %v174 = vsel %vm69, %v153, 0
    %v177 = vsel %vm69, %v154, 0
    %v180 = vsel %vm69, %v155, 0
    %v183 = vsel %vm69, %v156, 0
    %v186 = vsel %vm69, %v157, 0
    %v189 = vsel %vm69, %v158, 0
    %v192 = vsel %vm69, %v159, 0
    %v195 = vsel %vm69, %v160, 0
    %v198 = vsel %vm69, %v161, 0
    %v201 = vsel %vm69, %v162, 0
    %v204 = vsel %vm69, %v163, 0
    %v207 = vsel %vm69, %v164, 0
    %v210 = vsel %vm69, %v165, 0
    %v213 = vsel %vm69, %v166, 0
    %v216 = vsel %vm69, %v167, 0
    %v219 = vsel %vm69, %v168, 0
    %221 = vmatpush.msra.mxu0 0.0
    %222 = vmatpush.msra.mxu0 0.0
    %223 = vmatpush.msra.mxu0 0.0
    %224 = vmatpush.msra.mxu0 0.0
    %225 = vmatpush.msra.mxu0 0.0
    %226 = vmatpush.msra.mxu0 0.0
    %227 = vmatpush.msra.mxu0 0.0
    %228 = vmatpush.msra.mxu0 0.0
    %229 = vmatpush.msra.mxu0 0.0
    %230 = vmatpush.msra.mxu0 0.0
    %231 = vmatpush.msra.mxu0 0.0
    %232 = vmatpush.msra.mxu0 0.0
    %233 = vmatpush.msra.mxu0 %v172
    %234 = vmatpush.msra.mxu0 %v171
    %235 = vmatpush.msra.mxu0 %v170
    %236 = vmatpush.msra.mxu0 %v169
    %237 = vmatmul.f32.gmra.mxu0 %v174
    %v238 = vpop.f32.mrf.mxu0
    %v239 = vadd.f32 0.0, %v238
    %240 = vmatmul.f32.gmra.mxu0 %v177
    %v241 = vpop.f32.mrf.mxu0
    %v242 = vadd.f32 0.0, %v241
    %243 = vmatmul.f32.gmra.mxu0 %v180
    %v244 = vpop.f32.mrf.mxu0
    %v245 = vadd.f32 0.0, %v244
    %246 = vmatmul.f32.gmra.mxu0 %v183
    %v247 = vpop.f32.mrf.mxu0
    %v248 = vadd.f32 0.0, %v247
    %249 = vmatmul.f32.gmra.mxu0 %v186
    %v250 = vpop.f32.mrf.mxu0
    %v251 = vadd.f32 0.0, %v250
    %252 = vmatmul.f32.gmra.mxu0 %v189
    %v253 = vpop.f32.mrf.mxu0
    %v254 = vadd.f32 0.0, %v253
    %255 = vmatmul.f32.gmra.mxu0 %v192
    %v256 = vpop.f32.mrf.mxu0
    %v257 = vadd.f32 0.0, %v256
    %258 = vmatmul.f32.gmra.mxu0 %v195
    %v259 = vpop.f32.mrf.mxu0
    %v260 = vadd.f32 0.0, %v259
    %261 = vmatmul.f32.gmra.mxu0 %v198
    %v262 = vpop.f32.mrf.mxu0
    %v263 = vadd.f32 0.0, %v262
    %264 = vmatmul.f32.gmra.mxu0 %v201
    %v265 = vpop.f32.mrf.mxu0
    %v266 = vadd.f32 0.0, %v265
    %267 = vmatmul.f32.gmra.mxu0 %v204
    %v268 = vpop.f32.mrf.mxu0
    %v269 = vadd.f32 0.0, %v268
    %270 = vmatmul.f32.gmra.mxu0 %v207
    %v271 = vpop.f32.mrf.mxu0
    %v272 = vadd.f32 0.0, %v271
    %273 = vmatmul.f32.gmra.mxu0 %v210
    %v274 = vpop.f32.mrf.mxu0
    %v275 = vadd.f32 0.0, %v274
    %276 = vmatmul.f32.gmra.mxu0 %v213
    %v277 = vpop.f32.mrf.mxu0
    %v278 = vadd.f32 0.0, %v277
    %279 = vmatmul.f32.gmra.mxu0 %v216
    %v280 = vpop.f32.mrf.mxu0
    %v281 = vadd.f32 0.0, %v280
    %282 = vmatmul.f32.gmra.mxu0 %v219
    %v283 = vpop.f32.mrf.mxu0
    %v284 = vadd.f32 0.0, %v283
    %285 = vdwg.mxu0
    %vm286 = vcmask 64512
    %v287 = vsel %vm286, %v239, -inf
    %v288 = vrot.slane %v287, 4
    %v289 = vmax.f32 %v287, %v288
    %v290 = vrot.slane %v289, 2
    %v291 = vmax.f32 %v289, %v290
    %v292 = vrot.slane %v291, 1
    %v293 = vmax.f32 %v291, %v292
    %v294 = vsel %vm286, %v242, -inf
    %v295 = vrot.slane %v294, 4
    %v296 = vmax.f32 %v294, %v295
    %v297 = vrot.slane %v296, 2
    %v298 = vmax.f32 %v296, %v297
    %v299 = vrot.slane %v298, 1
    %v300 = vmax.f32 %v298, %v299
    %v301 = vsel %vm286, %v245, -inf
    %v302 = vrot.slane %v301, 4
    %v303 = vmax.f32 %v301, %v302
    %v304 = vrot.slane %v303, 2
    %v305 = vmax.f32 %v303, %v304
    %v306 = vrot.slane %v305, 1
    %v307 = vmax.f32 %v305, %v306
    %v308 = vsel %vm286, %v248, -inf
    %v309 = vrot.slane %v308, 4
    %v310 = vmax.f32 %v308, %v309
    %v311 = vrot.slane %v310, 2
    %v312 = vmax.f32 %v310, %v311
    %v313 = vrot.slane %v312, 1
    %v314 = vmax.f32 %v312, %v313
    %v315 = vsel %vm286, %v251, -inf
    %v316 = vrot.slane %v315, 4
    %v317 = vmax.f32 %v315, %v316
    %v318 = vrot.slane %v317, 2
    %v319 = vmax.f32 %v317, %v318
    %v320 = vrot.slane %v319, 1
    %v321 = vmax.f32 %v319, %v320
    %v322 = vsel %vm286, %v254, -inf
    %v323 = vrot.slane %v322, 4
    %v324 = vmax.f32 %v322, %v323
    %v325 = vrot.slane %v324, 2
    %v326 = vmax.f32 %v324, %v325
    %v327 = vrot.slane %v326, 1
    %v328 = vmax.f32 %v326, %v327
    %v329 = vsel %vm286, %v257, -inf
    %v330 = vrot.slane %v329, 4
    %v331 = vmax.f32 %v329, %v330
    %v332 = vrot.slane %v331, 2
    %v333 = vmax.f32 %v331, %v332
    %v334 = vrot.slane %v333, 1
    %v335 = vmax.f32 %v333, %v334
    %v336 = vsel %vm286, %v260, -inf
    %v337 = vrot.slane %v336, 4
    %v338 = vmax.f32 %v336, %v337
    %v339 = vrot.slane %v338, 2
    %v340 = vmax.f32 %v338, %v339
    %v341 = vrot.slane %v340, 1
    %v342 = vmax.f32 %v340, %v341
    %v343 = vsel %vm286, %v263, -inf
    %v344 = vrot.slane %v343, 4
    %v345 = vmax.f32 %v343, %v344
    %v346 = vrot.slane %v345, 2
    %v347 = vmax.f32 %v345, %v346
    %v348 = vrot.slane %v347, 1
    %v349 = vmax.f32 %v347, %v348
    %v350 = vsel %vm286, %v266, -inf
    %v351 = vrot.slane %v350, 4
    %v352 = vmax.f32 %v350, %v351
    %v353 = vrot.slane %v352, 2
    %v354 = vmax.f32 %v352, %v353
    %v355 = vrot.slane %v354, 1
    %v356 = vmax.f32 %v354, %v355
    %v357 = vsel %vm286, %v269, -inf
    %v358 = vrot.slane %v357, 4
    %v359 = vmax.f32 %v357, %v358
    %v360 = vrot.slane %v359, 2
    %v361 = vmax.f32 %v359, %v360
    %v362 = vrot.slane %v361, 1
    %v363 = vmax.f32 %v361, %v362
    %v364 = vsel %vm286, %v272, -inf
    %v365 = vrot.slane %v364, 4
    %v366 = vmax.f32 %v364, %v365
    %v367 = vrot.slane %v366, 2
    %v368 = vmax.f32 %v366, %v367
    %v369 = vrot.slane %v368, 1
    %v370 = vmax.f32 %v368, %v369
    %v371 = vsel %vm286, %v275, -inf
    %v372 = vrot.slane %v371, 4
    %v373 = vmax.f32 %v371, %v372
    %v374 = vrot.slane %v373, 2
    %v375 = vmax.f32 %v373, %v374
    %v376 = vrot.slane %v375, 1
    %v377 = vmax.f32 %v375, %v376
    %v378 = vsel %vm286, %v278, -inf
    %v379 = vrot.slane %v378, 4
    %v380 = vmax.f32 %v378, %v379
    %v381 = vrot.slane %v380, 2
    %v382 = vmax.f32 %v380, %v381
    %v383 = vrot.slane %v382, 1
    %v384 = vmax.f32 %v382, %v383
    %v385 = vsel %vm286, %v281, -inf
    %v386 = vrot.slane %v385, 4
    %v387 = vmax.f32 %v385, %v386
    %v388 = vrot.slane %v387, 2
    %v389 = vmax.f32 %v387, %v388
    %v390 = vrot.slane %v389, 1
    %v391 = vmax.f32 %v389, %v390
    %v392 = vsel %vm286, %v284, -inf
    %v393 = vrot.slane %v392, 4
    %v394 = vmax.f32 %v392, %v393
    %v395 = vrot.slane %v394, 2
    %v396 = vmax.f32 %v394, %v395
    %v397 = vrot.slane %v396, 1
    %v398 = vmax.f32 %v396, %v397
    %v399 = vsub.f32 %v239, %v293
    %v400 = vsub.f32 %v242, %v300
    %v401 = vsub.f32 %v245, %v307
    %v402 = vsub.f32 %v248, %v314
    %v403 = vsub.f32 %v251, %v321
    %v404 = vsub.f32 %v254, %v328
    %v405 = vsub.f32 %v257, %v335
    %v406 = vsub.f32 %v260, %v342
    %v407 = vsub.f32 %v263, %v349
    %v408 = vsub.f32 %v266, %v356
    %v409 = vsub.f32 %v269, %v363
    %v410 = vsub.f32 %v272, %v370
    %v411 = vsub.f32 %v275, %v377
    %v412 = vsub.f32 %v278, %v384
    %v413 = vsub.f32 %v281, %v391
    %v414 = vsub.f32 %v284, %v398
    %v415 = vmul.f32 %v399, 1.442695
    %v416 = vpow.pop %v415
    %v417 = vmul.f32 %v400, 1.442695
    %v418 = vpow.pop %v417
    %v419 = vmul.f32 %v401, 1.442695
    %v420 = vpow.pop %v419
    %v421 = vmul.f32 %v402, 1.442695
    %v422 = vpow.pop %v421
    %v423 = vmul.f32 %v403, 1.442695
    %v424 = vpow.pop %v423
    %v425 = vmul.f32 %v404, 1.442695
    %v426 = vpow.pop %v425
    %v427 = vmul.f32 %v405, 1.442695
    %v428 = vpow.pop %v427
    %v429 = vmul.f32 %v406, 1.442695
    %v430 = vpow.pop %v429
    %v431 = vmul.f32 %v407, 1.442695
    %v432 = vpow.pop %v431
    %v433 = vmul.f32 %v408, 1.442695
    %v434 = vpow.pop %v433
    %v435 = vmul.f32 %v409, 1.442695
    %v436 = vpow.pop %v435
    %v437 = vmul.f32 %v410, 1.442695
    %v438 = vpow.pop %v437
    %v439 = vmul.f32 %v411, 1.442695
    %v440 = vpow.pop %v439
    %v441 = vmul.f32 %v412, 1.442695
    %v442 = vpow.pop %v441
    %v443 = vmul.f32 %v413, 1.442695
    %v444 = vpow.pop %v443
    %v445 = vmul.f32 %v414, 1.442695
    %v446 = vpow.pop %v445
    %v447 = vsel %vm286, %v416, 0.0
    %v448 = vrot.slane %v447, 4
    %v449 = vadd.f32 %v447, %v448
    %v450 = vrot.slane %v449, 2
    %v451 = vadd.f32 %v449, %v450
    %v452 = vrot.slane %v451, 1
    %v453 = vadd.f32 %v451, %v452
    %v454 = vsel %vm286, %v418, 0.0
    %v455 = vrot.slane %v454, 4
    %v456 = vadd.f32 %v454, %v455
    %v457 = vrot.slane %v456, 2
    %v458 = vadd.f32 %v456, %v457
    %v459 = vrot.slane %v458, 1
    %v460 = vadd.f32 %v458, %v459
    %v461 = vsel %vm286, %v420, 0.0
    %v462 = vrot.slane %v461, 4
    %v463 = vadd.f32 %v461, %v462
    %v464 = vrot.slane %v463, 2
    %v465 = vadd.f32 %v463, %v464
    %v466 = vrot.slane %v465, 1
    %v467 = vadd.f32 %v465, %v466
    %v468 = vsel %vm286, %v422, 0.0
    %v469 = vrot.slane %v468, 4
    %v470 = vadd.f32 %v468, %v469
    %v471 = vrot.slane %v470, 2
    %v472 = vadd.f32 %v470, %v471
    %v473 = vrot.slane %v472, 1
    %v474 = vadd.f32 %v472, %v473
    %v475 = vsel %vm286, %v424, 0.0
    %v476 = vrot.slane %v475, 4
    %v477 = vadd.f32 %v475, %v476
    %v478 = vrot.slane %v477, 2
    %v479 = vadd.f32 %v477, %v478
    %v480 = vrot.slane %v479, 1
    %v481 = vadd.f32 %v479, %v480
    %v482 = vsel %vm286, %v426, 0.0
    %v483 = vrot.slane %v482, 4
    %v484 = vadd.f32 %v482, %v483
    %v485 = vrot.slane %v484, 2
    %v486 = vadd.f32 %v484, %v485
    %v487 = vrot.slane %v486, 1
    %v488 = vadd.f32 %v486, %v487
    %v489 = vsel %vm286, %v428, 0.0
    %v490 = vrot.slane %v489, 4
    %v491 = vadd.f32 %v489, %v490
    %v492 = vrot.slane %v491, 2
    %v493 = vadd.f32 %v491, %v492
    %v494 = vrot.slane %v493, 1
    %v495 = vadd.f32 %v493, %v494
    %v496 = vsel %vm286, %v430, 0.0
    %v497 = vrot.slane %v496, 4
    %v498 = vadd.f32 %v496, %v497
    %v499 = vrot.slane %v498, 2
    %v500 = vadd.f32 %v498, %v499
    %v501 = vrot.slane %v500, 1
    %v502 = vadd.f32 %v500, %v501
    %v503 = vsel %vm286, %v432, 0.0
    %v504 = vrot.slane %v503, 4
    %v505 = vadd.f32 %v503, %v504
    %v506 = vrot.slane %v505, 2
    %v507 = vadd.f32 %v505, %v506
    %v508 = vrot.slane %v507, 1
    %v509 = vadd.f32 %v507, %v508
    %v510 = vsel %vm286, %v434, 0.0
    %v511 = vrot.slane %v510, 4
    %v512 = vadd.f32 %v510, %v511
    %v513 = vrot.slane %v512, 2
    %v514 = vadd.f32 %v512, %v513
    %v515 = vrot.slane %v514, 1
    %v516 = vadd.f32 %v514, %v515
    %v517 = vsel %vm286, %v436, 0.0
    %v518 = vrot.slane %v517, 4
    %v519 = vadd.f32 %v517, %v518
    %v520 = vrot.slane %v519, 2
    %v521 = vadd.f32 %v519, %v520
    %v522 = vrot.slane %v521, 1
    %v523 = vadd.f32 %v521, %v522
    %v524 = vsel %vm286, %v438, 0.0
    %v525 = vrot.slane %v524, 4
    %v526 = vadd.f32 %v524, %v525
    %v527 = vrot.slane %v526, 2
    %v528 = vadd.f32 %v526, %v527
    %v529 = vrot.slane %v528, 1
    %v530 = vadd.f32 %v528, %v529
    %v531 = vsel %vm286, %v440, 0.0
    %v532 = vrot.slane %v531, 4
    %v533 = vadd.f32 %v531, %v532
    %v534 = vrot.slane %v533, 2
    %v535 = vadd.f32 %v533, %v534
    %v536 = vrot.slane %v535, 1
    %v537 = vadd.f32 %v535, %v536
    %v538 = vsel %vm286, %v442, 0.0
    %v539 = vrot.slane %v538, 4
    %v540 = vadd.f32 %v538, %v539
    %v541 = vrot.slane %v540, 2
    %v542 = vadd.f32 %v540, %v541
    %v543 = vrot.slane %v542, 1
    %v544 = vadd.f32 %v542, %v543
    %v545 = vsel %vm286, %v444, 0.0
    %v546 = vrot.slane %v545, 4
    %v547 = vadd.f32 %v545, %v546
    %v548 = vrot.slane %v547, 2
    %v549 = vadd.f32 %v547, %v548
    %v550 = vrot.slane %v549, 1
    %v551 = vadd.f32 %v549, %v550
    %v552 = vsel %vm286, %v446, 0.0
    %v553 = vrot.slane %v552, 4
    %v554 = vadd.f32 %v552, %v553
    %v555 = vrot.slane %v554, 2
    %v556 = vadd.f32 %v554, %v555
    %v557 = vrot.slane %v556, 1
    %v558 = vadd.f32 %v556, %v557
    %v559 = vrcp.pop %v453
    %v560 = vmul.f32 %v453, %v559
    %v561 = vsub.f32 1.0, %v560
    %v562 = vmul.f32 %v559, %v561
    %v563 = vadd.f32 %v559, %v562
    %vm564 = vweird.f32 %v453
    %vm565 = vweird.f32 %v559
    %vm566 = vmor %vm564, %vm565
    %v567 = vsel %vm566, %v559, %v563
    %v568 = vand.u32 2147483647, %v453
    %vm569 = vcmp.eq.f32.partialorder %v568, 8.507059e+37
    %v570 = vand.u32 %v453, 2147483648
    %v571 = vor.u32 1.1754944e-38, %v570
    %v572 = vsel %vm569, %v571, %v567
    %v573 = vmul.f32 1.0, %v572
    %v574 = vrcp.pop %v460
    %v575 = vmul.f32 %v460, %v574
    %v576 = vsub.f32 1.0, %v575
    %v577 = vmul.f32 %v574, %v576
    %v578 = vadd.f32 %v574, %v577
    %vm579 = vweird.f32 %v460
    %vm580 = vweird.f32 %v574
    %vm581 = vmor %vm579, %vm580
    %v582 = vsel %vm581, %v574, %v578
    %v583 = vand.u32 2147483647, %v460
    %vm584 = vcmp.eq.f32.partialorder %v583, 8.507059e+37
    %v585 = vand.u32 %v460, 2147483648
    %v586 = vor.u32 1.1754944e-38, %v585
    %v587 = vsel %vm584, %v586, %v582
    %v588 = vmul.f32 1.0, %v587
    %v589 = vrcp.pop %v467
    %v590 = vmul.f32 %v467, %v589
    %v591 = vsub.f32 1.0, %v590
    %v592 = vmul.f32 %v589, %v591
    %v593 = vadd.f32 %v589, %v592
    %vm594 = vweird.f32 %v467
    %vm595 = vweird.f32 %v589
    %vm596 = vmor %vm594, %vm595
    %v597 = vsel %vm596, %v589, %v593
    %v598 = vand.u32 2147483647, %v467
    %vm599 = vcmp.eq.f32.partialorder %v598, 8.507059e+37
    %v600 = vand.u32 %v467, 2147483648
    %v601 = vor.u32 1.1754944e-38, %v600
    %v602 = vsel %vm599, %v601, %v597
    %v603 = vmul.f32 1.0, %v602
    %v604 = vrcp.pop %v474
    %v605 = vmul.f32 %v474, %v604
    %v606 = vsub.f32 1.0, %v605
    %v607 = vmul.f32 %v604, %v606
    %v608 = vadd.f32 %v604, %v607
    %vm609 = vweird.f32 %v474
    %vm610 = vweird.f32 %v604
    %vm611 = vmor %vm609, %vm610
    %v612 = vsel %vm611, %v604, %v608
    %v613 = vand.u32 2147483647, %v474
    %vm614 = vcmp.eq.f32.partialorder %v613, 8.507059e+37
    %v615 = vand.u32 %v474, 2147483648
    %v616 = vor.u32 1.1754944e-38, %v615
    %v617 = vsel %vm614, %v616, %v612
    %v618 = vmul.f32 1.0, %v617
    %v619 = vrcp.pop %v481
    %v620 = vmul.f32 %v481, %v619
    %v621 = vsub.f32 1.0, %v620
    %v622 = vmul.f32 %v619, %v621
    %v623 = vadd.f32 %v619, %v622
    %vm624 = vweird.f32 %v481
    %vm625 = vweird.f32 %v619
    %vm626 = vmor %vm624, %vm625
    %v627 = vsel %vm626, %v619, %v623
    %v628 = vand.u32 2147483647, %v481
    %vm629 = vcmp.eq.f32.partialorder %v628, 8.507059e+37
    %v630 = vand.u32 %v481, 2147483648
    %v631 = vor.u32 1.1754944e-38, %v630
    %v632 = vsel %vm629, %v631, %v627
    %v633 = vmul.f32 1.0, %v632
    %v634 = vrcp.pop %v488
    %v635 = vmul.f32 %v488, %v634
    %v636 = vsub.f32 1.0, %v635
    %v637 = vmul.f32 %v634, %v636
    %v638 = vadd.f32 %v634, %v637
    %vm639 = vweird.f32 %v488
    %vm640 = vweird.f32 %v634
    %vm641 = vmor %vm639, %vm640
    %v642 = vsel %vm641, %v634, %v638
    %v643 = vand.u32 2147483647, %v488
    %vm644 = vcmp.eq.f32.partialorder %v643, 8.507059e+37
    %v645 = vand.u32 %v488, 2147483648
    %v646 = vor.u32 1.1754944e-38, %v645
    %v647 = vsel %vm644, %v646, %v642
    %v648 = vmul.f32 1.0, %v647
    %v649 = vrcp.pop %v495
    %v650 = vmul.f32 %v495, %v649
    %v651 = vsub.f32 1.0, %v650
    %v652 = vmul.f32 %v649, %v651
    %v653 = vadd.f32 %v649, %v652
    %vm654 = vweird.f32 %v495
    %vm655 = vweird.f32 %v649
    %vm656 = vmor %vm654, %vm655
    %v657 = vsel %vm656, %v649, %v653
    %v658 = vand.u32 2147483647, %v495
    %vm659 = vcmp.eq.f32.partialorder %v658, 8.507059e+37
    %v660 = vand.u32 %v495, 2147483648
    %v661 = vor.u32 1.1754944e-38, %v660
    %v662 = vsel %vm659, %v661, %v657
    %v663 = vmul.f32 1.0, %v662
    %v664 = vrcp.pop %v502
    %v665 = vmul.f32 %v502, %v664
    %v666 = vsub.f32 1.0, %v665
    %v667 = vmul.f32 %v664, %v666
    %v668 = vadd.f32 %v664, %v667
    %vm669 = vweird.f32 %v502
    %vm670 = vweird.f32 %v664
    %vm671 = vmor %vm669, %vm670
    %v672 = vsel %vm671, %v664, %v668
    %v673 = vand.u32 2147483647, %v502
    %vm674 = vcmp.eq.f32.partialorder %v673, 8.507059e+37
    %v675 = vand.u32 %v502, 2147483648
    %v676 = vor.u32 1.1754944e-38, %v675
    %v677 = vsel %vm674, %v676, %v672
    %v678 = vmul.f32 1.0, %v677
    %v679 = vrcp.pop %v509
    %v680 = vmul.f32 %v509, %v679
    %v681 = vsub.f32 1.0, %v680
    %v682 = vmul.f32 %v679, %v681
    %v683 = vadd.f32 %v679, %v682
    %vm684 = vweird.f32 %v509
    %vm685 = vweird.f32 %v679
    %vm686 = vmor %vm684, %vm685
    %v687 = vsel %vm686, %v679, %v683
    %v688 = vand.u32 2147483647, %v509
    %vm689 = vcmp.eq.f32.partialorder %v688, 8.507059e+37
    %v690 = vand.u32 %v509, 2147483648
    %v691 = vor.u32 1.1754944e-38, %v690
    %v692 = vsel %vm689, %v691, %v687
    %v693 = vmul.f32 1.0, %v692
    %v694 = vrcp.pop %v516
    %v695 = vmul.f32 %v516, %v694
    %v696 = vsub.f32 1.0, %v695
    %v697 = vmul.f32 %v694, %v696
    %v698 = vadd.f32 %v694, %v697
    %vm699 = vweird.f32 %v516
    %vm700 = vweird.f32 %v694
    %vm701 = vmor %vm699, %vm700
    %v702 = vsel %vm701, %v694, %v698
    %v703 = vand.u32 2147483647, %v516
    %vm704 = vcmp.eq.f32.partialorder %v703, 8.507059e+37
    %v705 = vand.u32 %v516, 2147483648
    %v706 = vor.u32 1.1754944e-38, %v705
    %v707 = vsel %vm704, %v706, %v702
    %v708 = vmul.f32 1.0, %v707
    %v709 = vrcp.pop %v523
    %v710 = vmul.f32 %v523, %v709
    %v711 = vsub.f32 1.0, %v710
    %v712 = vmul.f32 %v709, %v711
    %v713 = vadd.f32 %v709, %v712
    %vm714 = vweird.f32 %v523
    %vm715 = vweird.f32 %v709
    %vm716 = vmor %vm714, %vm715
    %v717 = vsel %vm716, %v709, %v713
    %v718 = vand.u32 2147483647, %v523
    %vm719 = vcmp.eq.f32.partialorder %v718, 8.507059e+37
    %v720 = vand.u32 %v523, 2147483648
    %v721 = vor.u32 1.1754944e-38, %v720
    %v722 = vsel %vm719, %v721, %v717
    %v723 = vmul.f32 1.0, %v722
    %v724 = vrcp.pop %v530
    %v725 = vmul.f32 %v530, %v724
    %v726 = vsub.f32 1.0, %v725
    %v727 = vmul.f32 %v724, %v726
    %v728 = vadd.f32 %v724, %v727
    %vm729 = vweird.f32 %v530
    %vm730 = vweird.f32 %v724
    %vm731 = vmor %vm729, %vm730
    %v732 = vsel %vm731, %v724, %v728
    %v733 = vand.u32 2147483647, %v530
    %vm734 = vcmp.eq.f32.partialorder %v733, 8.507059e+37
    %v735 = vand.u32 %v530, 2147483648
    %v736 = vor.u32 1.1754944e-38, %v735
    %v737 = vsel %vm734, %v736, %v732
    %v738 = vmul.f32 1.0, %v737
    %v739 = vrcp.pop %v537
    %v740 = vmul.f32 %v537, %v739
    %v741 = vsub.f32 1.0, %v740
    %v742 = vmul.f32 %v739, %v741
    %v743 = vadd.f32 %v739, %v742
    %vm744 = vweird.f32 %v537
    %vm745 = vweird.f32 %v739
    %vm746 = vmor %vm744, %vm745
    %v747 = vsel %vm746, %v739, %v743
    %v748 = vand.u32 2147483647, %v537
    %vm749 = vcmp.eq.f32.partialorder %v748, 8.507059e+37
    %v750 = vand.u32 %v537, 2147483648
    %v751 = vor.u32 1.1754944e-38, %v750
    %v752 = vsel %vm749, %v751, %v747
    %v753 = vmul.f32 1.0, %v752
    %v754 = vrcp.pop %v544
    %v755 = vmul.f32 %v544, %v754
    %v756 = vsub.f32 1.0, %v755
    %v757 = vmul.f32 %v754, %v756
    %v758 = vadd.f32 %v754, %v757
    %vm759 = vweird.f32 %v544
    %vm760 = vweird.f32 %v754
    %vm761 = vmor %vm759, %vm760
    %v762 = vsel %vm761, %v754, %v758
    %v763 = vand.u32 2147483647, %v544
    %vm764 = vcmp.eq.f32.partialorder %v763, 8.507059e+37
    %v765 = vand.u32 %v544, 2147483648
    %v766 = vor.u32 1.1754944e-38, %v765
    %v767 = vsel %vm764, %v766, %v762
    %v768 = vmul.f32 1.0, %v767
    %v769 = vrcp.pop %v551
    %v770 = vmul.f32 %v551, %v769
    %v771 = vsub.f32 1.0, %v770
    %v772 = vmul.f32 %v769, %v771
    %v773 = vadd.f32 %v769, %v772
    %vm774 = vweird.f32 %v551
    %vm775 = vweird.f32 %v769
    %vm776 = vmor %vm774, %vm775
    %v777 = vsel %vm776, %v769, %v773
    %v778 = vand.u32 2147483647, %v551
    %vm779 = vcmp.eq.f32.partialorder %v778, 8.507059e+37
    %v780 = vand.u32 %v551, 2147483648
    %v781 = vor.u32 1.1754944e-38, %v780
    %v782 = vsel %vm779, %v781, %v777
    %v783 = vmul.f32 1.0, %v782
    %v784 = vrcp.pop %v558
    %v785 = vmul.f32 %v558, %v784
    %v786 = vsub.f32 1.0, %v785
    %v787 = vmul.f32 %v784, %v786
    %v788 = vadd.f32 %v784, %v787
    %vm789 = vweird.f32 %v558
    %vm790 = vweird.f32 %v784
    %vm791 = vmor %vm789, %vm790
    %v792 = vsel %vm791, %v784, %v788
    %v793 = vand.u32 2147483647, %v558
    %vm794 = vcmp.eq.f32.partialorder %v793, 8.507059e+37
    %v795 = vand.u32 %v558, 2147483648
    %v796 = vor.u32 1.1754944e-38, %v795
    %v797 = vsel %vm794, %v796, %v792
    %v798 = vmul.f32 1.0, %v797
    %v799 = vmul.f32 %v416, %v573
    %v800 = vmul.f32 %v418, %v588
    %v801 = vmul.f32 %v420, %v603
    %v802 = vmul.f32 %v422, %v618
    %v803 = vmul.f32 %v424, %v633
    %v804 = vmul.f32 %v426, %v648
    %v805 = vmul.f32 %v428, %v663
    %v806 = vmul.f32 %v430, %v678
    %v807 = vmul.f32 %v432, %v693
    %v808 = vmul.f32 %v434, %v708
    %v809 = vmul.f32 %v436, %v723
    %v810 = vmul.f32 %v438, %v738
    %v811 = vmul.f32 %v440, %v753
    %v812 = vmul.f32 %v442, %v768
    %v813 = vmul.f32 %v444, %v783
    %v814 = vmul.f32 %v446, %v798
    %v815 = vld [vmem:[%s6] sm:$0xff]
    %v817 = vsel %vm286, %v799, 0
    %v820 = vsel %vm286, %v800, 0
    %v823 = vsel %vm286, %v801, 0
    %v826 = vsel %vm286, %v802, 0
    %v829 = vsel %vm286, %v803, 0
    %v832 = vsel %vm286, %v804, 0
    %v835 = vsel %vm286, %v805, 0
    %v838 = vsel %vm286, %v806, 0
    %v841 = vsel %vm286, %v807, 0
    %v844 = vsel %vm286, %v808, 0
    %v847 = vsel %vm286, %v809, 0
    %v850 = vsel %vm286, %v810, 0
    %v853 = vsel %vm286, %v811, 0
    %v856 = vsel %vm286, %v812, 0
    %v859 = vsel %vm286, %v813, 0
    %v862 = vsel %vm286, %v814, 0
    %864 = vmatpush.msra.mxu0 0.0
    %865 = vmatpush.msra.mxu0 0.0
    %866 = vmatpush.msra.mxu0 0.0
    %867 = vmatpush.msra.mxu0 0.0
    %868 = vmatpush.msra.mxu0 0.0
    %869 = vmatpush.msra.mxu0 0.0
    %870 = vmatpush.msra.mxu0 0.0
    %871 = vmatpush.msra.mxu0 0.0
    %872 = vmatpush.msra.mxu0 0.0
    %873 = vmatpush.msra.mxu0 0.0
    %874 = vmatpush.msra.mxu0 0.0
    %875 = vmatpush.msra.mxu0 0.0
    %876 = vmatpush.msra.mxu0 0.0
    %877 = vmatpush.msra.mxu0 0.0
    %878 = vmatpush.msra.mxu0 0.0
    %879 = vmatpush.msra.mxu0 %v815
    %880 = vmatmul.f32.gmra.mxu0 %v817
    %v881 = vpop.f32.mrf.mxu0
    %v882 = vadd.f32 0.0, %v881
    %883 = vmatmul.f32.gmra.mxu0 %v820
    %v884 = vpop.f32.mrf.mxu0
    %v885 = vadd.f32 0.0, %v884
    %886 = vmatmul.f32.gmra.mxu0 %v823
    %v887 = vpop.f32.mrf.mxu0
    %v888 = vadd.f32 0.0, %v887
    %889 = vmatmul.f32.gmra.mxu0 %v826
    %v890 = vpop.f32.mrf.mxu0
    %v891 = vadd.f32 0.0, %v890
    %892 = vmatmul.f32.gmra.mxu0 %v829
    %v893 = vpop.f32.mrf.mxu0
    %v894 = vadd.f32 0.0, %v893
    %895 = vmatmul.f32.gmra.mxu0 %v832
    %v896 = vpop.f32.mrf.mxu0
    %v897 = vadd.f32 0.0, %v896
    %898 = vmatmul.f32.gmra.mxu0 %v835
    %v899 = vpop.f32.mrf.mxu0
    %v900 = vadd.f32 0.0, %v899
    %901 = vmatmul.f32.gmra.mxu0 %v838
    %v902 = vpop.f32.mrf.mxu0
    %v903 = vadd.f32 0.0, %v902
    %904 = vmatmul.f32.gmra.mxu0 %v841
    %v905 = vpop.f32.mrf.mxu0
    %v906 = vadd.f32 0.0, %v905
    %907 = vmatmul.f32.gmra.mxu0 %v844
    %v908 = vpop.f32.mrf.mxu0
    %v909 = vadd.f32 0.0, %v908
    %910 = vmatmul.f32.gmra.mxu0 %v847
    %v911 = vpop.f32.mrf.mxu0
    %v912 = vadd.f32 0.0, %v911
    %913 = vmatmul.f32.gmra.mxu0 %v850
    %v914 = vpop.f32.mrf.mxu0
    %v915 = vadd.f32 0.0, %v914
    %916 = vmatmul.f32.gmra.mxu0 %v853
    %v917 = vpop.f32.mrf.mxu0
    %v918 = vadd.f32 0.0, %v917
    %919 = vmatmul.f32.gmra.mxu0 %v856
    %v920 = vpop.f32.mrf.mxu0
    %v921 = vadd.f32 0.0, %v920
    %922 = vmatmul.f32.gmra.mxu0 %v859
    %v923 = vpop.f32.mrf.mxu0
    %v924 = vadd.f32 0.0, %v923
    %925 = vmatmul.f32.gmra.mxu0 %v862
    %v926 = vpop.f32.mrf.mxu0
    %v927 = vadd.f32 0.0, %v926
    %928 = vdwg.mxu0
    %929 = vrot.lane.b32.xlu0 %v94, 64
    %v930 = vpop.permute.xlu0 %929
    %931 = vrot.lane.b32.xlu0 %v97, 64
    %v932 = vpop.permute.xlu0 %931
    %v935 = vmul.f32 %v882, %v930
    %v936 = vmul.f32 %v885, %v930
    %v937 = vmul.f32 %v888, %v930
    %v938 = vmul.f32 %v891, %v930
    %v939 = vmul.f32 %v894, %v930
    %v940 = vmul.f32 %v897, %v930
    %v941 = vmul.f32 %v900, %v930
    %v942 = vmul.f32 %v903, %v930
    %v943 = vmul.f32 %v906, %v932
    %v944 = vmul.f32 %v909, %v932
    %v945 = vmul.f32 %v912, %v932
    %v946 = vmul.f32 %v915, %v932
    %v947 = vmul.f32 %v918, %v932
    %v948 = vmul.f32 %v921, %v932
    %v949 = vmul.f32 %v924, %v932
    %v950 = vmul.f32 %v927, %v932
    %v951 = vsel %vm69, %v935, 0.0
    %v952 = vrot.slane %v951, 4
    %v953 = vadd.f32 %v951, %v952
    %v954 = vrot.slane %v953, 2
    %v955 = vadd.f32 %v953, %v954
    %v956 = vrot.slane %v955, 1
    %v957 = vadd.f32 %v955, %v956
    %v958 = vsel %vm69, %v936, 0.0
    %v959 = vrot.slane %v958, 4
    %v960 = vadd.f32 %v958, %v959
    %v961 = vrot.slane %v960, 2
    %v962 = vadd.f32 %v960, %v961
    %v963 = vrot.slane %v962, 1
    %v964 = vadd.f32 %v962, %v963
    %v965 = vsel %vm69, %v937, 0.0
    %v966 = vrot.slane %v965, 4
    %v967 = vadd.f32 %v965, %v966
    %v968 = vrot.slane %v967, 2
    %v969 = vadd.f32 %v967, %v968
    %v970 = vrot.slane %v969, 1
    %v971 = vadd.f32 %v969, %v970
    %v972 = vsel %vm69, %v938, 0.0
    %v973 = vrot.slane %v972, 4
    %v974 = vadd.f32 %v972, %v973
    %v975 = vrot.slane %v974, 2
    %v976 = vadd.f32 %v974, %v975
    %v977 = vrot.slane %v976, 1
    %v978 = vadd.f32 %v976, %v977
    %v979 = vsel %vm69, %v939, 0.0
    %v980 = vrot.slane %v979, 4
    %v981 = vadd.f32 %v979, %v980
    %v982 = vrot.slane %v981, 2
    %v983 = vadd.f32 %v981, %v982
    %v984 = vrot.slane %v983, 1
    %v985 = vadd.f32 %v983, %v984
    %v986 = vsel %vm69, %v940, 0.0
    %v987 = vrot.slane %v986, 4
    %v988 = vadd.f32 %v986, %v987
    %v989 = vrot.slane %v988, 2
    %v990 = vadd.f32 %v988, %v989
    %v991 = vrot.slane %v990, 1
    %v992 = vadd.f32 %v990, %v991
    %v993 = vsel %vm69, %v941, 0.0
    %v994 = vrot.slane %v993, 4
    %v995 = vadd.f32 %v993, %v994
    %v996 = vrot.slane %v995, 2
    %v997 = vadd.f32 %v995, %v996
    %v998 = vrot.slane %v997, 1
    %v999 = vadd.f32 %v997, %v998
    %v1000 = vsel %vm69, %v942, 0.0
    %v1001 = vrot.slane %v1000, 4
    %v1002 = vadd.f32 %v1000, %v1001
    %v1003 = vrot.slane %v1002, 2
    %v1004 = vadd.f32 %v1002, %v1003
    %v1005 = vrot.slane %v1004, 1
    %v1006 = vadd.f32 %v1004, %v1005
    %v1007 = vsel %vm69, %v943, 0.0
    %v1008 = vrot.slane %v1007, 4
    %v1009 = vadd.f32 %v1007, %v1008
    %v1010 = vrot.slane %v1009, 2
    %v1011 = vadd.f32 %v1009, %v1010
    %v1012 = vrot.slane %v1011, 1
    %v1013 = vadd.f32 %v1011, %v1012
    %v1014 = vsel %vm69, %v944, 0.0
    %v1015 = vrot.slane %v1014, 4
    %v1016 = vadd.f32 %v1014, %v1015
    %v1017 = vrot.slane %v1016, 2
    %v1018 = vadd.f32 %v1016, %v1017
    %v1019 = vrot.slane %v1018, 1
    %v1020 = vadd.f32 %v1018, %v1019
    %v1021 = vsel %vm69, %v945, 0.0
    %v1022 = vrot.slane %v1021, 4
    %v1023 = vadd.f32 %v1021, %v1022
    %v1024 = vrot.slane %v1023, 2
    %v1025 = vadd.f32 %v1023, %v1024
    %v1026 = vrot.slane %v1025, 1
    %v1027 = vadd.f32 %v1025, %v1026
    %v1028 = vsel %vm69, %v946, 0.0
    %v1029 = vrot.slane %v1028, 4
    %v1030 = vadd.f32 %v1028, %v1029
    %v1031 = vrot.slane %v1030, 2
    %v1032 = vadd.f32 %v1030, %v1031
    %v1033 = vrot.slane %v1032, 1
    %v1034 = vadd.f32 %v1032, %v1033
    %v1035 = vsel %vm69, %v947, 0.0
    %v1036 = vrot.slane %v1035, 4
    %v1037 = vadd.f32 %v1035, %v1036
    %v1038 = vrot.slane %v1037, 2
    %v1039 = vadd.f32 %v1037, %v1038
    %v1040 = vrot.slane %v1039, 1
    %v1041 = vadd.f32 %v1039, %v1040
    %v1042 = vsel %vm69, %v948, 0.0
    %v1043 = vrot.slane %v1042, 4
    %v1044 = vadd.f32 %v1042, %v1043
    %v1045 = vrot.slane %v1044, 2
    %v1046 = vadd.f32 %v1044, %v1045
    %v1047 = vrot.slane %v1046, 1
    %v1048 = vadd.f32 %v1046, %v1047
    %v1049 = vsel %vm69, %v949, 0.0
    %v1050 = vrot.slane %v1049, 4
    %v1051 = vadd.f32 %v1049, %v1050
    %v1052 = vrot.slane %v1051, 2
    %v1053 = vadd.f32 %v1051, %v1052
    %v1054 = vrot.slane %v1053, 1
    %v1055 = vadd.f32 %v1053, %v1054
    %v1056 = vsel %vm69, %v950, 0.0
    %v1057 = vrot.slane %v1056, 4
    %v1058 = vadd.f32 %v1056, %v1057
    %v1059 = vrot.slane %v1058, 2
    %v1060 = vadd.f32 %v1058, %v1059
    %v1061 = vrot.slane %v1060, 1
    %v1062 = vadd.f32 %v1060, %v1061
    %v1063 = vld [vmem:[#allocation5] sm:$0xff]
    %v1064 = vld [vmem:[#allocation5 + $0x8] sm:$0xff]
    %v1065 = vld [vmem:[#allocation5 + $0x10] sm:$0xff]
    %v1066 = vld [vmem:[#allocation5 + $0x18] sm:$0xff]
    %v1067 = vld [vmem:[%s4] sm:$0x1]
    %v1069 = vperm.slane %v1067, 0
    %vm1087 = vcmask 1041409
    %v1088 = vsel %vm1087, %v964, %v957
    %vm1089 = vcmask 1042434
    %v1090 = vsel %vm1089, %v971, %v1088
    %vm1091 = vcmask 1043459
    %v1092 = vsel %vm1091, %v978, %v1090
    %vm1093 = vcmask 1044484
    %v1094 = vsel %vm1093, %v985, %v1092
    %vm1095 = vcmask 1045509
    %v1096 = vsel %vm1095, %v992, %v1094
    %vm1097 = vcmask 1046534
    %v1098 = vsel %vm1097, %v999, %v1096
    %vm1099 = vcmask 1047559
    %v1100 = vsel %vm1099, %v1006, %v1098
    %v1101 = vsel %vm1087, %v1020, %v1013
    %v1102 = vsel %vm1089, %v1027, %v1101
    %v1103 = vsel %vm1091, %v1034, %v1102
    %v1104 = vsel %vm1093, %v1041, %v1103
    %v1105 = vsel %vm1095, %v1048, %v1104
    %v1106 = vsel %vm1097, %v1055, %v1105
    %v1107 = vsel %vm1099, %v1062, %v1106
    %v1108 = vsel %vm69, %v1100, 0
    %v1110 = vsel %vm69, %v1107, 0
    %1112 = vmatpush.msra.mxu0 0.0
    %1113 = vmatpush.msra.mxu0 0.0
    %1114 = vmatpush.msra.mxu0 0.0
    %1115 = vmatpush.msra.mxu0 0.0
    %1116 = vmatpush.msra.mxu0 0.0
    %1117 = vmatpush.msra.mxu0 0.0
    %1118 = vmatpush.msra.mxu0 0.0
    %1119 = vmatpush.msra.mxu0 0.0
    %1120 = vmatpush.msra.mxu0 0.0
    %1121 = vmatpush.msra.mxu0 0.0
    %1122 = vmatpush.msra.mxu0 0.0
    %1123 = vmatpush.msra.mxu0 0.0
    %1124 = vmatpush.msra.mxu0 %v1066
    %1125 = vmatpush.msra.mxu0 %v1065
    %1126 = vmatpush.msra.mxu0 %v1064
    %1127 = vmatpush.msra.mxu0 %v1063
    %1128 = vmatmul.f32.gmra.mxu0 %v1108
    %v1129 = vpop.f32.mrf.mxu0
    %v1130 = vadd.f32 %v1069, %v1129
    %1131 = vmatmul.f32.gmra.mxu0 %v1110
    %v1132 = vpop.f32.mrf.mxu0
    %v1133 = vadd.f32 %v1069, %v1132
    %1134 = vdwg.mxu0
    %1135 = vst.msk [vmem:[#allocation7] sm:$0xff] %vm69, %v1130
    %1136 = vst.msk [vmem:[#allocation7 + $0x8] sm:$0xff] %vm69, %v1133
    // Predicated region
    $region38: #{tpu_custom_call.1} parent=1 // pred_check
      _
    $region39: #{tpu_custom_call.1} parent=1 // pred_check_branch
      %1138 = sbr.rel (0) target = $region41
    $region40: #{tpu_custom_call.1} parent=1 // pred_region
      %1140 = vsyncadd [#allocation4], 0
      %s1141 = sshll.u32 [#allocation7], 4
      %s1142 = int_to_ptr.vmem [resolvable:$true] %s1141
      %s1143 = sshll.u32 %s7, 4
      %s1144 = int_to_ptr.hbm [resolvable:$true] %s1143
      %1149 = dma.vmem_to_hbm [thread:$0]  %s1142, 256, %s1144, [#allocation4], 128, 128, 8
    $region41: #{tpu_custom_call.1} parent=1 // pred_fallthru
      _
    // Predicated region
    $region42: #{tpu_custom_call.1} parent=1 // pred_check
      _
    $region43: #{tpu_custom_call.1} parent=1 // pred_check_branch
      %1151 = sbr.rel (0) target = $region45
    $region44: #{tpu_custom_call.1} parent=1 // pred_region
      %1153 = dma.done [#allocation4], 256
    $region45: #{tpu_custom_call.1} parent=1 // pred_fallthru
      _
    %1154 = vsyncpa [#allocation3], 1
    %1155 = vsyncpa [#allocation6], 1
    %1156 = vsyncpa [#allocation4], 1

</llo_original>
